<compile_context>
chip_gen: v5e
topology: v5e:2x2
jax: 0.10.0
libtpu: 0.0.40
codegen_flags: <defaults>
</compile_context>

<pallas_src>
import jax
import jax.numpy as jnp
import numpy as np
from jax.experimental import pallas as pl
from jax.experimental.pallas import tpu as pltpu


def _round_up(x: int, m: int) -> int:
    return ((x + m - 1) // m) * m


def _sublane_granule(dtype) -> int:
    # Sublane-packing granularity: f32 -> 8 rows, bf16 -> 16, int8/fp8 -> 32.
    return 8 * max(1, 4 // jnp.dtype(dtype).itemsize)


def _choose_tile_c(c: int, max_tile_c: int) -> int:
    if c <= 128:
        return c                                   # one full-width block
    if c % 128 == 0:
        # Aim for >= 2 class blocks so both v7x TensorCores get work, cap block width.
        half = _round_up((c + 1) // 2, 128)
        return min(max_tile_c, half)
    if c <= max_tile_c:
        return c                                   # full-dim block, no 128 constraint
    return max_tile_c                              # multiple of 128; ragged last block


def _make_f1_kernel(n_true: int, macro: bool, tile_n: int):
    n_true_f = float(n_true)

    def kernel(labels_ref, outputs_ref, out_ref, tp_acc, sl_acc, sp_acc):
        k = pl.program_id(1)

        @pl.when(k == 0)
        def _init():
            tp_acc[...] = jnp.zeros_like(tp_acc)
            sl_acc[...] = jnp.zeros_like(sl_acc)
            sp_acc[...] = jnp.zeros_like(sp_acc)

        shape = labels_ref.shape                       # (tile_n, tile_c) static
        # Mask the ragged last sample tile (rows >= N contribute nothing).
        rows_left = n_true - k * tile_n
        row_ids = jax.lax.broadcasted_iota(jnp.int32, shape, 0)
        row_valid = row_ids < rows_left

        lab = jnp.where(row_valid, labels_ref[...].astype(jnp.float32), 0.0)
        pred = jnp.where(row_valid & (outputs_ref[...] > 0), 1.0, 0.0)

        # Regroup rows into (tile_n//8, 8, tile_c): the per-step reduction becomes
        # plain vreg adds on the VPU; the cross-sublane reduce is deferred to the
        # epilogue (one XLU reduce per accumulator total, not per step).
        g = tile_n // 8
        lab3 = lab.reshape(g, 8, shape[1])
        pred3 = pred.reshape(g, 8, shape[1])

        tp_acc[...] += jnp.sum(lab3 * pred3, axis=0)
        sl_acc[...] += jnp.sum(lab3, axis=0)
        sp_acc[...] += jnp.sum(pred3, axis=0)

        @pl.when(k == pl.num_programs(1) - 1)
        def _finalize():
            tp = jnp.sum(tp_acc[...], axis=0, keepdims=True)   # (1, tile_c)
            sl = jnp.sum(sl_acc[...], axis=0, keepdims=True)
            sp = jnp.sum(sp_acc[...], axis=0, keepdims=True)

            # denom_pos = 2*tp + fp + fn = sl + sp
            denom_pos = sl + sp
            f1_pos = jnp.where(
                denom_pos > 0,
                (2.0 * tp) / jnp.where(denom_pos > 0, denom_pos, 1.0),
                0.0)

            if macro:
                # tn = N - sl - sp + tp; denom_neg = 2*tn + fn + fp = 2*N - sl - sp
                tn = n_true_f - sl - sp + tp
                denom_neg = 2.0 * n_true_f - sl - sp
                f1_neg = jnp.where(
                    denom_neg > 0,
                    (2.0 * tn) / jnp.where(denom_neg > 0, denom_neg, 1.0),
                    0.0)
                # TODO(synk): sklearn's binary macro-F1 averages only over classes
                # present in a column; here we always average over both {0, 1}.
                out_ref[...] = 0.5 * (f1_pos + f1_neg)
            else:
                out_ref[...] = f1_pos

    return kernel


def multilabel_f1(labels: jax.Array, outputs: jax.Array, average=None,
                  *, tile_n: int = 1024, tile_c: int = 512) -> jax.Array:
    """labels: (N, C) binary, outputs: (N, C) logits. Returns (C,) float32 F1 scores."""
    N, C = labels.shape
    assert outputs.shape == (N, C)
    macro = average == "macro"

    # Sample-tile granularity satisfies both inputs' sublane packing (and %8 reshape).
    granule = max(_sublane_granule(labels.dtype), _sublane_granule(outputs.dtype), 8)
    tile_n = max(granule, min(_round_up(tile_n, granule), _round_up(N, granule)))
    tile_c = _choose_tile_c(C, max_tile_c=max(tile_c, 128) if C > 128 else tile_c)

    grid_c = pl.cdiv(C, tile_c)
    grid_n = pl.cdiv(N, tile_n)

    itemsize = (jnp.dtype(labels.dtype).itemsize + jnp.dtype(outputs.dtype).itemsize)
    # 2 inputs x 2 pipeline buffers x tile, plus accumulators/outputs and margin.
    in_tile_bytes = tile_n * tile_c * itemsize
    vmem_limit = int(min(48 << 20, max(8 << 20, 2 * in_tile_bytes + (4 << 20))))

    out = pl.pallas_call(
        _make_f1_kernel(N, macro, tile_n),
        out_shape=jax.ShapeDtypeStruct((1, C), jnp.float32),
        grid=(grid_c, grid_n),
        in_specs=[
            pl.BlockSpec((tile_n, tile_c), lambda c, k: (k, c)),
            pl.BlockSpec((tile_n, tile_c), lambda c, k: (k, c)),
        ],
        out_specs=pl.BlockSpec((1, tile_c), lambda c, k: (0, c)),
        scratch_shapes=[
            pltpu.VMEM((8, tile_c), jnp.float32),
            pltpu.VMEM((8, tile_c), jnp.float32),
            pltpu.VMEM((8, tile_c), jnp.float32),
        ],
        compiler_params=pltpu.CompilerParams(
            dimension_semantics=("parallel", "arbitrary"),
            vmem_limit_bytes=vmem_limit,
        ),
        cost_estimate=pl.CostEstimate(
            flops=6 * N * C, transcendentals=0,
            bytes_accessed=int(N * C * itemsize + 4 * C)),
    )(labels, outputs)

    return out[0, :C]


# ------------------------- numpy references -------------------------

def _ref_f1_none(labels: np.ndarray, outputs: np.ndarray) -> np.ndarray:
    preds = (outputs > 0).astype(np.float64)
    lab = labels.astype(np.float64)
    tp = (lab * preds).sum(axis=0)
    fp = ((1 - lab) * preds).sum(axis=0)
    fn = (lab * (1 - preds)).sum(axis=0)
    denom = 2 * tp + fp + fn
    return np.where(denom > 0, 2 * tp / np.where(denom > 0, denom, 1.0), 0.0)


def _ref_f1_macro(labels: np.ndarray, outputs: np.ndarray) -> np.ndarray:
    preds = (outputs > 0).astype(np.float64)
    lab = labels.astype(np.float64)
    n = lab.shape[0]
    tp = (lab * preds).sum(axis=0)
    sl = lab.sum(axis=0)
    sp = preds.sum(axis=0)
    fp = sp - tp
    fn = sl - tp
    tn = n - sl - sp + tp
    dpos = 2 * tp + fp + fn
    dneg = 2 * tn + fp + fn
    f1p = np.where(dpos > 0, 2 * tp / np.where(dpos > 0, dpos, 1.0), 0.0)
    f1n = np.where(dneg > 0, 2 * tn / np.where(dneg > 0, dneg, 1.0), 0.0)
    return 0.5 * (f1p + f1n)


if __name__ == "__main__":
    key = jax.random.PRNGKey(0)

    # Small case (single tile in both axes).
    k1, k2 = jax.random.split(key)
    N, C = 8, 16
    labels = jax.random.bernoulli(k1, p=0.5, shape=(N, C)).astype(jnp.float32)
    outputs = jax.random.normal(k2, (N, C), dtype=jnp.float32)

    f1 = multilabel_f1(labels, outputs, average=None)
    jax.block_until_ready(f1)
    np.testing.assert_allclose(np.asarray(f1),
                               _ref_f1_none(np.asarray(labels), np.asarray(outputs)),
                               rtol=1e-5, atol=1e-6)

    f1m = multilabel_f1(labels, outputs, average="macro")
    jax.block_until_ready(f1m)
    np.testing.assert_allclose(np.asarray(f1m),
                               _ref_f1_macro(np.asarray(labels), np.asarray(outputs)),
                               rtol=1e-5, atol=1e-6)

    # Ragged case: N not a multiple of the sample tile -> exercises the in-kernel
    # row mask (no jnp.pad anywhere).
    k3, k4 = jax.random.split(k2)
    N2, C2 = 300, 16
    labels2 = jax.random.bernoulli(k3, p=0.3, shape=(N2, C2)).astype(jnp.float32)
    outputs2 = jax.random.normal(k4, (N2, C2), dtype=jnp.float32)

    f1_r = multilabel_f1(labels2, outputs2, average=None, tile_n=128)
    jax.block_until_ready(f1_r)
    np.testing.assert_allclose(np.asarray(f1_r),
                               _ref_f1_none(np.asarray(labels2), np.asarray(outputs2)),
                               rtol=1e-5, atol=1e-6)

    f1m_r = multilabel_f1(labels2, outputs2, average="macro", tile_n=128)
    jax.block_until_ready(f1m_r)
    np.testing.assert_allclose(np.asarray(f1m_r),
                               _ref_f1_macro(np.asarray(labels2), np.asarray(outputs2)),
                               rtol=1e-5, atol=1e-6)

    print("KERNEL_OK")
</pallas_src>

<mosaic_0001>
module attributes {stable_mosaic.version = 11 : i64} {
  func.func @kernel(%arg0: i32, %arg1: i32, %arg2: memref<8x16xf32, #tpu.memory_space<vmem>>, %arg3: memref<8x16xf32, #tpu.memory_space<vmem>>, %arg4: memref<1x16xf32, #tpu.memory_space<vmem>>, %arg5: memref<8x16xf32, #tpu.memory_space<vmem>>, %arg6: memref<8x16xf32, #tpu.memory_space<vmem>>, %arg7: memref<8x16xf32, #tpu.memory_space<vmem>>) attributes {dimension_semantics = [#tpu.dimension_semantics<parallel>, #tpu.dimension_semantics<arbitrary>], iteration_bounds = array<i64: 1, 1>, scalar_prefetch = 0 : i64, scratch_operands = 3 : i64, tpu.core_type = #tpu.core_type<tc>, window_params = [{transform_indices = @transform_0, window_bounds = array<i64: 8, 16>}, {transform_indices = @transform_1, window_bounds = array<i64: 8, 16>}, {transform_indices = @transform_2, window_bounds = array<i64: 1, 16>}]} {
    %c0_i32 = arith.constant 0 : i32
    %0 = arith.cmpi eq, %arg1, %c0_i32 : i32
    %1 = arith.extui %0 : i1 to i32
    %c0_i32_0 = arith.constant 0 : i32
    %2 = arith.cmpi ne, %1, %c0_i32_0 : i32
    scf.if %2 {
      %cst_25 = arith.constant 0.000000e+00 : f32
      %36 = vector.broadcast %cst_25 : f32 to vector<8x16xf32>
      %c0_26 = arith.constant 0 : index
      %c0_27 = arith.constant 0 : index
      %37 = vector.load %arg5[%c0_26, %c0_27] : memref<8x16xf32, #tpu.memory_space<vmem>>, vector<8x16xf32>
      tpu.vector_store %arg5[%c0_26, %c0_27], %36 {strides = array<i32>} : memref<8x16xf32, #tpu.memory_space<vmem>>, vector<8x16xf32>,
      %cst_28 = arith.constant 0.000000e+00 : f32
      %38 = vector.broadcast %cst_28 : f32 to vector<8x16xf32>
      %c0_29 = arith.constant 0 : index
      %c0_30 = arith.constant 0 : index
      %39 = vector.load %arg6[%c0_29, %c0_30] : memref<8x16xf32, #tpu.memory_space<vmem>>, vector<8x16xf32>
      tpu.vector_store %arg6[%c0_29, %c0_30], %38 {strides = array<i32>} : memref<8x16xf32, #tpu.memory_space<vmem>>, vector<8x16xf32>,
      %cst_31 = arith.constant 0.000000e+00 : f32
      %40 = vector.broadcast %cst_31 : f32 to vector<8x16xf32>
      %c0_32 = arith.constant 0 : index
      %c0_33 = arith.constant 0 : index
      %41 = vector.load %arg7[%c0_32, %c0_33] : memref<8x16xf32, #tpu.memory_space<vmem>>, vector<8x16xf32>
      tpu.vector_store %arg7[%c0_32, %c0_33], %40 {strides = array<i32>} : memref<8x16xf32, #tpu.memory_space<vmem>>, vector<8x16xf32>,
    } else {
    }
    %c8_i32 = arith.constant 8 : i32
    %3 = arith.muli %arg1, %c8_i32 : i32
    %c8_i32_1 = arith.constant 8 : i32
    %4 = arith.subi %c8_i32_1, %3 : i32
    %5 = tpu.iota {dimensions = array<i32: 0>} : vector<8x16xi32>
    %6 = vector.broadcast %4 : i32 to vector<8x16xi32>
    %7 = arith.cmpi slt, %5, %6 : vector<8x16xi32>
    %c0 = arith.constant 0 : index
    %c0_2 = arith.constant 0 : index
    %8 = vector.load %arg2[%c0, %c0_2] : memref<8x16xf32, #tpu.memory_space<vmem>>, vector<8x16xf32>
    %cst = arith.constant 0.000000e+00 : f32
    %9 = vector.broadcast %cst : f32 to vector<8x16xf32>
    %10 = arith.select %7, %8, %9 : vector<8x16xi1>, vector<8x16xf32>
    %c0_3 = arith.constant 0 : index
    %c0_4 = arith.constant 0 : index
    %11 = vector.load %arg3[%c0_3, %c0_4] : memref<8x16xf32, #tpu.memory_space<vmem>>, vector<8x16xf32>
    %cst_5 = arith.constant 0.000000e+00 : f32
    %12 = vector.broadcast %cst_5 : f32 to vector<8x16xf32>
    %13 = arith.cmpf ogt, %11, %12 : vector<8x16xf32>
    %14 = arith.andi %7, %13 : vector<8x16xi1>
    %cst_6 = arith.constant 1.000000e+00 : f32
    %cst_7 = arith.constant 0.000000e+00 : f32
    %15 = vector.broadcast %cst_6 : f32 to vector<8x16xf32>
    %16 = vector.broadcast %cst_7 : f32 to vector<8x16xf32>
    %17 = arith.select %14, %15, %16 : vector<8x16xi1>, vector<8x16xf32>
    %18 = vector.shape_cast %10 : vector<8x16xf32> to vector<1x8x16xf32>
    %19 = vector.shape_cast %17 : vector<8x16xf32> to vector<1x8x16xf32>
    %c0_8 = arith.constant 0 : index
    %c0_9 = arith.constant 0 : index
    %20 = vector.load %arg5[%c0_8, %c0_9] : memref<8x16xf32, #tpu.memory_space<vmem>>, vector<8x16xf32>
    %21 = arith.mulf %18, %19 : vector<1x8x16xf32>
    %cst_10 = arith.constant dense<0.000000e+00> : vector<8x16xf32>
    %22 = vector.multi_reduction <add>, %21, %cst_10 [0] : vector<1x8x16xf32> to vector<8x16xf32>
    %23 = arith.addf %20, %22 : vector<8x16xf32>
    %c0_11 = arith.constant 0 : index
    %c0_12 = arith.constant 0 : index
    %24 = vector.load %arg5[%c0_11, %c0_12] : memref<8x16xf32, #tpu.memory_space<vmem>>, vector<8x16xf32>
    tpu.vector_store %arg5[%c0_11, %c0_12], %23 {strides = array<i32>} : memref<8x16xf32, #tpu.memory_space<vmem>>, vector<8x16xf32>,
    %c0_13 = arith.constant 0 : index
    %c0_14 = arith.constant 0 : index
    %25 = vector.load %arg6[%c0_13, %c0_14] : memref<8x16xf32, #tpu.memory_space<vmem>>, vector<8x16xf32>
    %cst_15 = arith.constant dense<0.000000e+00> : vector<8x16xf32>
    %26 = vector.multi_reduction <add>, %18, %cst_15 [0] : vector<1x8x16xf32> to vector<8x16xf32>
    %27 = arith.addf %25, %26 : vector<8x16xf32>
    %c0_16 = arith.constant 0 : index
    %c0_17 = arith.constant 0 : index
    %28 = vector.load %arg6[%c0_16, %c0_17] : memref<8x16xf32, #tpu.memory_space<vmem>>, vector<8x16xf32>
    tpu.vector_store %arg6[%c0_16, %c0_17], %27 {strides = array<i32>} : memref<8x16xf32, #tpu.memory_space<vmem>>, vector<8x16xf32>,
    %c0_18 = arith.constant 0 : index
    %c0_19 = arith.constant 0 : index
    %29 = vector.load %arg7[%c0_18, %c0_19] : memref<8x16xf32, #tpu.memory_space<vmem>>, vector<8x16xf32>
    %cst_20 = arith.constant dense<0.000000e+00> : vector<8x16xf32>
    %30 = vector.multi_reduction <add>, %19, %cst_20 [0] : vector<1x8x16xf32> to vector<8x16xf32>
    %31 = arith.addf %29, %30 : vector<8x16xf32>
    %c0_21 = arith.constant 0 : index
    %c0_22 = arith.constant 0 : index
    %32 = vector.load %arg7[%c0_21, %c0_22] : memref<8x16xf32, #tpu.memory_space<vmem>>, vector<8x16xf32>
    tpu.vector_store %arg7[%c0_21, %c0_22], %31 {strides = array<i32>} : memref<8x16xf32, #tpu.memory_space<vmem>>, vector<8x16xf32>,
    %c0_i32_23 = arith.constant 0 : i32
    %33 = arith.cmpi eq, %arg1, %c0_i32_23 : i32
    %34 = arith.extui %33 : i1 to i32
    %c0_i32_24 = arith.constant 0 : i32
    %35 = arith.cmpi ne, %34, %c0_i32_24 : i32
    scf.if %35 {
      %c0_25 = arith.constant 0 : index
      %c0_26 = arith.constant 0 : index
      %36 = vector.load %arg5[%c0_25, %c0_26] : memref<8x16xf32, #tpu.memory_space<vmem>>, vector<8x16xf32>
      %cst_27 = arith.constant dense<0.000000e+00> : vector<16xf32>
      %37 = vector.multi_reduction <add>, %36, %cst_27 [0] : vector<8x16xf32> to vector<16xf32>
      %38 = vector.shape_cast %37 : vector<16xf32> to vector<1x16xf32>
      %c0_28 = arith.constant 0 : index
      %c0_29 = arith.constant 0 : index
      %39 = vector.load %arg6[%c0_28, %c0_29] : memref<8x16xf32, #tpu.memory_space<vmem>>, vector<8x16xf32>
      %cst_30 = arith.constant dense<0.000000e+00> : vector<16xf32>
      %40 = vector.multi_reduction <add>, %39, %cst_30 [0] : vector<8x16xf32> to vector<16xf32>
      %41 = vector.shape_cast %40 : vector<16xf32> to vector<1x16xf32>
      %c0_31 = arith.constant 0 : index
      %c0_32 = arith.constant 0 : index
      %42 = vector.load %arg7[%c0_31, %c0_32] : memref<8x16xf32, #tpu.memory_space<vmem>>, vector<8x16xf32>
      %cst_33 = arith.constant dense<0.000000e+00> : vector<16xf32>
      %43 = vector.multi_reduction <add>, %42, %cst_33 [0] : vector<8x16xf32> to vector<16xf32>
      %44 = vector.shape_cast %43 : vector<16xf32> to vector<1x16xf32>
      %45 = arith.addf %41, %44 : vector<1x16xf32>
      %cst_34 = arith.constant 0.000000e+00 : f32
      %46 = vector.broadcast %cst_34 : f32 to vector<1x16xf32>
      %47 = arith.cmpf ogt, %45, %46 : vector<1x16xf32>
      %cst_35 = arith.constant 2.000000e+00 : f32
      %48 = vector.broadcast %cst_35 : f32 to vector<1x16xf32>
      %49 = arith.mulf %48, %38 : vector<1x16xf32>
      %cst_36 = arith.constant 0.000000e+00 : f32
      %50 = vector.broadcast %cst_36 : f32 to vector<1x16xf32>
      %51 = arith.cmpf ogt, %45, %50 : vector<1x16xf32>
      %cst_37 = arith.constant 1.000000e+00 : f32
      %52 = vector.broadcast %cst_37 : f32 to vector<1x16xf32>
      %53 = arith.select %51, %45, %52 : vector<1x16xi1>, vector<1x16xf32>
      %54 = arith.divf %49, %53 : vector<1x16xf32>
      %cst_38 = arith.constant 0.000000e+00 : f32
      %55 = vector.broadcast %cst_38 : f32 to vector<1x16xf32>
      %56 = arith.select %47, %54, %55 : vector<1x16xi1>, vector<1x16xf32>
      %c0_39 = arith.constant 0 : index
      %c0_40 = arith.constant 0 : index
      %57 = vector.load %arg4[%c0_39, %c0_40] : memref<1x16xf32, #tpu.memory_space<vmem>>, vector<1x16xf32>
      tpu.vector_store %arg4[%c0_39, %c0_40], %56 {strides = array<i32>} : memref<1x16xf32, #tpu.memory_space<vmem>>, vector<1x16xf32>,
    } else {
    }
    return
  }
  func.func @transform_0(%arg0: i32, %arg1: i32) -> (i32, i32) {
    %c0_i32 = arith.constant 0 : i32
    return %arg1, %arg0 : i32, i32
  }
  func.func @transform_1(%arg0: i32, %arg1: i32) -> (i32, i32) {
    %c0_i32 = arith.constant 0 : i32
    return %arg1, %arg0 : i32, i32
  }
  func.func @transform_2(%arg0: i32, %arg1: i32) -> (i32, i32) {
    %c0_i32 = arith.constant 0 : i32
    %c0_i32_0 = arith.constant 0 : i32
    return %c0_i32, %arg0 : i32, i32
  }
}

</mosaic_0001>

<llo_original>
// kernel: tpu_custom_call.1
$region0: #{tpu_custom_call.1}
  #allocation0 [shape = 'u32[]', space=smem, size = 0x4, offset = 0x4, fixed_abs, tag = 'smem constant byte address 0x4 - core index']
  #allocation1 [shape = 'u32[72,128]{1,0:T(1,128)}', space=vmem, size = 0x9000, scoped, tag = 'internal scratch']
  #allocation2 [shape = 'f32[8,16]{1,0:T(8,128)}', space=vmem, size = 0x1000, scoped, tag = 'scratch operand']
  #allocation3 [shape = 'f32[8,16]{1,0:T(8,128)}', space=vmem, size = 0x1000, scoped, tag = 'scratch operand']
  #allocation4 [shape = 'f32[8,16]{1,0:T(8,128)}', space=vmem, size = 0x1000, scoped, tag = 'scratch operand']
  %s0 = inlined_call_operand.hbm [shape: f32[8,16], index: 0, kind: input, shape index: {}]
  %s1 = inlined_call_operand.hbm [shape: f32[8,16], index: 1, kind: input, shape index: {}]
  %s2 = inlined_call_operand.hbm [shape: f32[1,16], index: 2, kind: output, shape index: {}]
  %s3 = sld [smem:[#allocation0]]
  $region34: #{tpu_custom_call.1} parent=0
    _
  %s5 = ssub.s32 1, %s3
  %s6 = scalar_select 0, %s5, %s3
  $region1: #{tpu_custom_call.1} parent=0
    #allocation5 [shape = 'u8[4096]{0}', space=vmem, size = 0x1000, scoped, tag = 'input window, operand 0, single buffered']
    #allocation6 [shape = 's32[1]{0}', space=sflag, size = 0x4, scoped, tag = 'scoped memory for tpu_custom_call.1']
    #allocation7 [shape = 's32[1]{0}', space=sflag, size = 0x4, scoped, tag = 'scoped memory for tpu_custom_call.1']
    #allocation8 [shape = 'u8[4096]{0}', space=vmem, size = 0x1000, scoped, tag = 'input window, operand 1, single buffered']
    #allocation9 [shape = 's32[1]{0}', space=sflag, size = 0x4, scoped, tag = 'scoped memory for tpu_custom_call.1']
    #allocation10 [shape = 'u8[512]{0}', space=vmem, size = 0x400, scoped, tag = 'output window, operand 0, single buffered']
    %7 = vsyncpa [#allocation6], 0
    %8 = vsyncpa [#allocation9], 0
    %9 = vsyncpa [#allocation7], 0
    // Predicated region
    $region2: #{tpu_custom_call.1} parent=1 // pred_check
      _
    $region3: #{tpu_custom_call.1} parent=1 // pred_check_branch
      %11 = sbr.rel (0) target = $region5
    $region4: #{tpu_custom_call.1} parent=1 // pred_region
      %13 = vsyncadd [#allocation6], 0
      %s15 = sshll.u32 %s0, 4
      %s16 = int_to_ptr.hbm [resolvable:$true] %s15
      %s17 = sshll.u32 [#allocation5], 4
      %s18 = int_to_ptr.vmem [resolvable:$true] %s17
      %20 = dma.hbm_to_vmem [thread:$0]  %s16, 128, %s18, [#allocation6]
    $region5: #{tpu_custom_call.1} parent=1 // pred_fallthru
      _
    // Predicated region
    $region6: #{tpu_custom_call.1} parent=1 // pred_check
      _
    $region7: #{tpu_custom_call.1} parent=1 // pred_check_branch
      %22 = sbr.rel (0) target = $region9
    $region8: #{tpu_custom_call.1} parent=1 // pred_region
      %24 = vsyncadd [#allocation9], 0
      %s26 = sshll.u32 %s1, 4
      %s27 = int_to_ptr.hbm [resolvable:$true] %s26
      %s28 = sshll.u32 [#allocation8], 4
      %s29 = int_to_ptr.vmem [resolvable:$true] %s28
      %31 = dma.hbm_to_vmem [thread:$0]  %s27, 128, %s29, [#allocation9]
    $region9: #{tpu_custom_call.1} parent=1 // pred_fallthru
      _
    // Predicated region
    $region10: #{tpu_custom_call.1} parent=1 // pred_check
      _
    $region11: #{tpu_custom_call.1} parent=1 // pred_check_branch
      %33 = sbr.rel (0) target = $region13
    $region12: #{tpu_custom_call.1} parent=1 // pred_region
      %35 = dma.done [#allocation6], 128
    $region13: #{tpu_custom_call.1} parent=1 // pred_fallthru
      _
    // Predicated region
    $region14: #{tpu_custom_call.1} parent=1 // pred_check
      _
    $region15: #{tpu_custom_call.1} parent=1 // pred_check_branch
      %37 = sbr.rel (0) target = $region17
    $region16: #{tpu_custom_call.1} parent=1 // pred_region
      %39 = dma.done [#allocation9], 128
    $region17: #{tpu_custom_call.1} parent=1 // pred_fallthru
      _
    %p40 = scmp.eq.s32.totalorder 0, 0
    // Predicated region
    $region18: #{tpu_custom_call.1} parent=1 // pred_check
      %p41 = pneg %p40
    $region19: #{tpu_custom_call.1} parent=1 // pred_check_branch
      %43 = sbr.rel (%p41) target = $region21
    $region20: #{tpu_custom_call.1} parent=1 // pred_region
      %vm44 = vcmask 130048
      %45 = vst.msk [vmem:[#allocation2] sm:$0xff] %vm44, 0.0
      %46 = vst.msk [vmem:[#allocation3] sm:$0xff] %vm44, 0.0
      %47 = vst.msk [vmem:[#allocation4] sm:$0xff] %vm44, 0.0
    $region21: #{tpu_custom_call.1} parent=1 // pred_fallthru
      _
    %s48 = smul.u32 0, 8
    %s49 = ssub.s32 8, %s48
    %v50 = vlaneseq
    %v51 = vshrl.u32 %v50, 7
    %v52 = vstv %s49
    %vm53 = vcmp.lt.s32.totalorder %v51, %v52
    %v54 = vld [vmem:[#allocation5] sm:$0xff]
    %v55 = vsel %vm53, %v54, 0.0
    %v56 = vld [vmem:[#allocation8] sm:$0xff]
    %vm57 = vcmp.gt.f32.partialorder %v56, 0.0
    %vm58 = vmand %vm53, %vm57
    %v59 = vsel %vm58, 1.0, 0.0
    %v60 = vld [vmem:[#allocation2] sm:$0xff]
    %v61 = vmul.f32 %v55, %v59
    %v62 = vadd.f32 %v61, 0.0
    %v63 = vadd.f32 %v60, %v62
    %vm64 = vcmask 130048
    %65 = vst.msk [vmem:[#allocation2] sm:$0xff] %vm64, %v63
    %v66 = vld [vmem:[#allocation3] sm:$0xff]
    %v67 = vadd.f32 %v55, 0.0
    %v68 = vadd.f32 %v66, %v67
    %69 = vst.msk [vmem:[#allocation3] sm:$0xff] %vm64, %v68
    %v70 = vld [vmem:[#allocation4] sm:$0xff]
    %v71 = vadd.f32 %v59, 0.0
    %v72 = vadd.f32 %v70, %v71
    %73 = vst.msk [vmem:[#allocation4] sm:$0xff] %vm64, %v72
    // Predicated region
    $region22: #{tpu_custom_call.1} parent=1 // pred_check
      %p74 = pneg %p40
    $region23: #{tpu_custom_call.1} parent=1 // pred_check_branch
      %76 = sbr.rel (%p74) target = $region25
    $region24: #{tpu_custom_call.1} parent=1 // pred_region
      %v77 = vld [vmem:[#allocation2] sm:$0xff]
      %v78 = vsel %vm64, %v77, 0.0
      %v79 = vrot.slane %v78, 4
      %v80 = vadd.f32 %v78, %v79
      %v81 = vrot.slane %v80, 2
      %v82 = vadd.f32 %v80, %v81
      %v83 = vrot.slane %v82, 1
      %v84 = vadd.f32 %v82, %v83
      %v85 = vld [vmem:[#allocation3] sm:$0xff]
      %v86 = vsel %vm64, %v85, 0.0
      %v87 = vrot.slane %v86, 4
      %v88 = vadd.f32 %v86, %v87
      %v89 = vrot.slane %v88, 2
      %v90 = vadd.f32 %v88, %v89
      %v91 = vrot.slane %v90, 1
      %v92 = vadd.f32 %v90, %v91
      %v93 = vld [vmem:[#allocation4] sm:$0xff]
      %v94 = vsel %vm64, %v93, 0.0
      %v95 = vrot.slane %v94, 4
      %v96 = vadd.f32 %v94, %v95
      %v97 = vrot.slane %v96, 2
      %v98 = vadd.f32 %v96, %v97
      %v99 = vrot.slane %v98, 1
      %v100 = vadd.f32 %v98, %v99
      %v101 = vadd.f32 %v92, %v100
      %vm102 = vcmp.gt.f32.partialorder %v101, 0.0
      %v103 = vmul.f32 %v84, 2.0
      %v104 = vsel %vm102, %v101, 1.0
      %v105 = vrcp.pop %v104
      %v106 = vmul.f32 %v104, %v105
      %v107 = vsub.f32 1.0, %v106
      %v108 = vmul.f32 %v105, %v107
      %v109 = vadd.f32 %v105, %v108
      %vm110 = vweird.f32 %v104
      %vm111 = vweird.f32 %v105
      %vm112 = vmor %vm110, %vm111
      %v113 = vsel %vm112, %v105, %v109
      %v114 = vand.u32 2147483647, %v104
      %vm115 = vcmp.eq.f32.partialorder %v114, 8.507059e+37
      %v116 = vand.u32 %v104, 2147483648
      %v117 = vor.u32 1.1754944e-38, %v116
      %v118 = vsel %vm115, %v117, %v113
      %v119 = vmul.f32 %v103, %v118
      %v120 = vsel %vm102, %v119, 0.0
      %vm121 = vcmask 122880
      %122 = vst.msk [vmem:[#allocation10] sm:$0x1] %vm121, %v120
    $region25: #{tpu_custom_call.1} parent=1 // pred_fallthru
      _
    // Predicated region
    $region26: #{tpu_custom_call.1} parent=1 // pred_check
      _
    $region27: #{tpu_custom_call.1} parent=1 // pred_check_branch
      %124 = sbr.rel (0) target = $region29
    $region28: #{tpu_custom_call.1} parent=1 // pred_region
      %126 = vsyncadd [#allocation7], 0
      %s128 = sshll.u32 [#allocation10], 4
      %s129 = int_to_ptr.vmem [resolvable:$true] %s128
      %s130 = sshll.u32 %s2, 4
      %s131 = int_to_ptr.hbm [resolvable:$true] %s130
      %133 = dma.vmem_to_hbm [thread:$0]  %s129, 16, %s131, [#allocation7]
    $region29: #{tpu_custom_call.1} parent=1 // pred_fallthru
      _
    // Predicated region
    $region30: #{tpu_custom_call.1} parent=1 // pred_check
      _
    $region31: #{tpu_custom_call.1} parent=1 // pred_check_branch
      %135 = sbr.rel (0) target = $region33
    $region32: #{tpu_custom_call.1} parent=1 // pred_region
      %137 = dma.done [#allocation7], 16
    $region33: #{tpu_custom_call.1} parent=1 // pred_fallthru
      _
    %138 = vsyncpa [#allocation6], 1
    %139 = vsyncpa [#allocation9], 1
    %140 = vsyncpa [#allocation7], 1

</llo_original>
